<compile_context>
chip_gen: v5e
topology: v5e:2x2
jax: 0.10.0
libtpu: 0.0.40
codegen_flags: <defaults>
</compile_context>

<pallas_src>
import jax
import jax.numpy as jnp
from jax.experimental import pallas as pl
from jax.experimental.pallas import tpu as pltpu


def _cnn01_kernel(xs_ref, w1t_ref, w2t_ref, wfc_ref, b_ref, o_ref):
    # xs_ref : (H*3, TB)        input rows (index h*3+w), batch in lanes
    # w1t_ref: (H1*16, H*3)     block-Toeplitz conv1 weights
    # w2t_ref: (H2*32, HP*16)   block-Toeplitz conv2 weights
    # wfc_ref: (out, H2*32)     fc weights, column order j*32 + c
    # b_ref  : (out, 1)         fc bias
    # o_ref  : (out, TB)        lane-dense output slab
    tb = xs_ref.shape[-1]
    hp16 = w2t_ref.shape[-1]
    hp = hp16 // 16

    xs = xs_ref[...]

    # convBlock1: Conv2d(1,16,(3,3),valid) + ReLU — all H1 output rows in one matmul.
    a1 = jnp.dot(w1t_ref[...], xs, preferred_element_type=jnp.float32)      # (H1*16, TB)
    a1 = jnp.maximum(a1, 0.0)

    # MaxPool2d((2,1), stride=2): pairwise max over adjacent conv1 output rows.
    a1p = a1[: hp * 32].reshape(hp, 2, 16, tb)
    pooled = jnp.maximum(a1p[:, 0], a1p[:, 1]).reshape(hp16, tb)            # (HP*16, TB)

    # convBlock2: Conv2d(16,32,(3,1),valid) + ReLU — all H2 output rows in one matmul.
    a2 = jnp.dot(w2t_ref[...], pooled, preferred_element_type=jnp.float32)  # (H2*32, TB)
    a2 = jnp.maximum(a2, 0.0)

    # fc1 — single matmul, lane-dense (out, TB) store.
    o_ref[...] = (jnp.dot(wfc_ref[...], a2, preferred_element_type=jnp.float32)
                  + b_ref[...])


def cnn01_forward(x, w1, w2, wfc, bfc, *, tb=128):
    """x: (N,1,H,3) f32; w1: (16,1,3,3); w2: (32,16,3,1); wfc: (out, 32*H2); bfc: (out,)."""
    N, C, H, W = x.shape
    assert C == 1 and W == 3, "CNN_01 requires a single input channel and width 3"
    H1 = H - 2                       # conv1 output height (width collapses to 1)
    HP = H1 // 2                     # after MaxPool((2,1), stride=2)
    H2 = HP - 2                      # conv2 output height
    assert H2 >= 1, "input_length must be >= 8"
    out_size = bfc.shape[0]
    assert wfc.shape == (out_size, 32 * H2)

    TB = min(tb, N)
    Npad = pl.cdiv(N, TB) * TB

    # ---- pure-layout input / parameter re-packing (no compute) ----
    xs = x[:, 0, :, :].reshape(N, H * W).astype(jnp.float32).T               # (H*3, N)
    if Npad != N:
        xs = jnp.pad(xs, ((0, 0), (0, Npad - N)))

    w1blk = w1[:, 0, :, :].reshape(16, 9).astype(jnp.float32)                # [c, kh*3+kw]
    w1t = jnp.zeros((H1 * 16, H * 3), jnp.float32)
    for i in range(H1):
        w1t = w1t.at[i * 16:(i + 1) * 16, i * 3:i * 3 + 9].set(w1blk)

    w2blk = jnp.transpose(w2[:, :, :, 0], (0, 2, 1)).reshape(32, 48)         # [o, kh*16+c]
    w2blk = w2blk.astype(jnp.float32)
    w2t = jnp.zeros((H2 * 32, HP * 16), jnp.float32)
    for j in range(H2):
        w2t = w2t.at[j * 32:(j + 1) * 32, j * 16:j * 16 + 48].set(w2blk)

    # PyTorch flatten is channel-major (c*H2 + j); our a2 rows are (j*32 + c).
    wfc_r = jnp.transpose(wfc.reshape(out_size, 32, H2), (0, 2, 1)).reshape(out_size, H2 * 32)
    wfc_r = wfc_r.astype(jnp.float32)
    bfc_r = bfc.reshape(out_size, 1).astype(jnp.float32)

    y = pl.pallas_call(
        _cnn01_kernel,
        out_shape=jax.ShapeDtypeStruct((out_size, Npad), jnp.float32),
        grid=(Npad // TB,),
        in_specs=[
            pl.BlockSpec((H * W, TB), lambda g: (0, g)),
            pl.BlockSpec((H1 * 16, H * W), lambda g: (0, 0)),
            pl.BlockSpec((H2 * 32, HP * 16), lambda g: (0, 0)),
            pl.BlockSpec((out_size, H2 * 32), lambda g: (0, 0)),
            pl.BlockSpec((out_size, 1), lambda g: (0, 0)),
        ],
        out_specs=pl.BlockSpec((out_size, TB), lambda g: (0, g)),
        compiler_params=pltpu.CompilerParams(dimension_semantics=("parallel",)),
    )(xs, w1t, w2t, wfc_r, bfc_r)
    return y.T[:N]                                                            # (N, out)


def cnn01_reference(x, w1, w2, wfc, bfc):
    """Pure-JAX reference matching the PyTorch forward (for validation only)."""
    dn = ("NCHW", "OIHW", "NCHW")
    c1 = jax.lax.conv_general_dilated(x, w1, (1, 1), "VALID", dimension_numbers=dn)
    c1 = jnp.maximum(c1, 0.0)
    p1 = jax.lax.reduce_window(c1, -jnp.inf, jax.lax.max,
                               window_dimensions=(1, 1, 2, 1),
                               window_strides=(1, 1, 2, 2),
                               padding="VALID")
    c2 = jax.lax.conv_general_dilated(p1, w2, (1, 1), "VALID", dimension_numbers=dn)
    c2 = jnp.maximum(c2, 0.0)
    flat = c2.reshape(c2.shape[0], -1)
    return flat @ wfc.T + bfc


if __name__ == "__main__":
    # batch=256 -> two 128-sample grid steps (exercises batching + both v7x TCs).
    N, input_length, W_in, out_size = 256, 16, 3, 8
    fc_in = 32 * ((input_length - 6) // 2)

    key = jax.random.PRNGKey(0)
    k1, k2, k3, k4, k5 = jax.random.split(key, 5)
    x = jax.random.normal(k1, (N, 1, input_length, W_in), jnp.float32)
    w1 = jax.random.normal(k2, (16, 1, 3, 3), jnp.float32) * 0.3
    w2 = jax.random.normal(k3, (32, 16, 3, 1), jnp.float32) * 0.1
    wfc = jax.random.normal(k4, (out_size, fc_in), jnp.float32) * 0.05
    bfc = jax.random.normal(k5, (out_size,), jnp.float32) * 0.05

    y = cnn01_forward(x, w1, w2, wfc, bfc)
    y = jax.block_until_ready(y)

    y_ref = cnn01_reference(x, w1, w2, wfc, bfc)
    assert y.shape == (N, out_size)
    assert jnp.allclose(y, y_ref, atol=1e-3, rtol=1e-3), (y, y_ref)
    print("KERNEL_OK")
</pallas_src>

<mosaic_0001>
module attributes {stable_mosaic.version = 11 : i64} {
  func.func @_cnn01_kernel(%arg0: i32, %arg1: memref<48x128xf32, #tpu.memory_space<vmem>>, %arg2: memref<224x48xf32, #tpu.memory_space<vmem>>, %arg3: memref<160x112xf32, #tpu.memory_space<vmem>>, %arg4: memref<8x160xf32, #tpu.memory_space<vmem>>, %arg5: memref<8x1xf32, #tpu.memory_space<vmem>>, %arg6: memref<8x128xf32, #tpu.memory_space<vmem>>) attributes {dimension_semantics = [#tpu.dimension_semantics<parallel>], iteration_bounds = array<i64: 2>, scalar_prefetch = 0 : i64, scratch_operands = 0 : i64, tpu.core_type = #tpu.core_type<tc>, window_params = [{transform_indices = @transform_0, window_bounds = array<i64: 48, 128>}, {pipeline_mode = #tpu.pipeline_mode<synchronous>, transform_indices = @transform_1, window_bounds = array<i64: 224, 48>}, {pipeline_mode = #tpu.pipeline_mode<synchronous>, transform_indices = @transform_2, window_bounds = array<i64: 160, 112>}, {pipeline_mode = #tpu.pipeline_mode<synchronous>, transform_indices = @transform_3, window_bounds = array<i64: 8, 160>}, {pipeline_mode = #tpu.pipeline_mode<synchronous>, transform_indices = @transform_4, window_bounds = array<i64: 8, 1>}, {transform_indices = @transform_5, window_bounds = array<i64: 8, 128>}]} {
    %c0 = arith.constant 0 : index
    %c0_0 = arith.constant 0 : index
    %0 = vector.load %arg1[%c0, %c0_0] : memref<48x128xf32, #tpu.memory_space<vmem>>, vector<48x128xf32>
    %c0_1 = arith.constant 0 : index
    %c0_2 = arith.constant 0 : index
    %1 = vector.load %arg2[%c0_1, %c0_2] : memref<224x48xf32, #tpu.memory_space<vmem>>, vector<224x48xf32>
    %cst = arith.constant dense<0.000000e+00> : vector<224x128xf32>
    %2 = tpu.matmul %1, %0, %cst {dimension_numbers = #tpu.dot_dimension_numbers<[1], [0], [0], [1], [0, 0, 1, 1], [], []>} : vector<224x48xf32>, vector<48x128xf32>, vector<224x128xf32> -> vector<224x128xf32>
    %cst_3 = arith.constant 0.000000e+00 : f32
    %3 = vector.broadcast %cst_3 : f32 to vector<224x128xf32>
    %4 = arith.maximumf %2, %3 : vector<224x128xf32>
    %5 = vector.shape_cast %4 : vector<224x128xf32> to vector<7x2x16x128xf32>
    %6 = vector.extract_strided_slice %5 {offsets = [0, 0, 0, 0], sizes = [7, 1, 16, 128], strides = [1, 1, 1, 1]} : vector<7x2x16x128xf32> to vector<7x1x16x128xf32>
    %7 = vector.shape_cast %6 : vector<7x1x16x128xf32> to vector<7x16x128xf32>
    %8 = vector.extract_strided_slice %5 {offsets = [0, 1, 0, 0], sizes = [7, 1, 16, 128], strides = [1, 1, 1, 1]} : vector<7x2x16x128xf32> to vector<7x1x16x128xf32>
    %9 = vector.shape_cast %8 : vector<7x1x16x128xf32> to vector<7x16x128xf32>
    %10 = arith.maximumf %7, %9 : vector<7x16x128xf32>
    %11 = vector.shape_cast %10 : vector<7x16x128xf32> to vector<112x128xf32>
    %c0_4 = arith.constant 0 : index
    %c0_5 = arith.constant 0 : index
    %12 = vector.load %arg3[%c0_4, %c0_5] : memref<160x112xf32, #tpu.memory_space<vmem>>, vector<160x112xf32>
    %cst_6 = arith.constant dense<0.000000e+00> : vector<160x128xf32>
    %13 = tpu.matmul %12, %11, %cst_6 {dimension_numbers = #tpu.dot_dimension_numbers<[1], [0], [0], [1], [0, 0, 1, 1], [], []>} : vector<160x112xf32>, vector<112x128xf32>, vector<160x128xf32> -> vector<160x128xf32>
    %cst_7 = arith.constant 0.000000e+00 : f32
    %14 = vector.broadcast %cst_7 : f32 to vector<160x128xf32>
    %15 = arith.maximumf %13, %14 : vector<160x128xf32>
    %c0_8 = arith.constant 0 : index
    %c0_9 = arith.constant 0 : index
    %16 = vector.load %arg4[%c0_8, %c0_9] : memref<8x160xf32, #tpu.memory_space<vmem>>, vector<8x160xf32>
    %cst_10 = arith.constant dense<0.000000e+00> : vector<8x128xf32>
    %17 = tpu.matmul %16, %15, %cst_10 {dimension_numbers = #tpu.dot_dimension_numbers<[1], [0], [0], [1], [0, 0, 1, 1], [], []>} : vector<8x160xf32>, vector<160x128xf32>, vector<8x128xf32> -> vector<8x128xf32>
    %c0_11 = arith.constant 0 : index
    %c0_12 = arith.constant 0 : index
    %18 = vector.load %arg5[%c0_11, %c0_12] : memref<8x1xf32, #tpu.memory_space<vmem>>, vector<8x1xf32>
    %19 = vector.broadcast %18 : vector<8x1xf32> to vector<8x128xf32>
    %20 = arith.addf %17, %19 : vector<8x128xf32>
    %c0_13 = arith.constant 0 : index
    %c0_14 = arith.constant 0 : index
    %21 = vector.load %arg6[%c0_13, %c0_14] : memref<8x128xf32, #tpu.memory_space<vmem>>, vector<8x128xf32>
    tpu.vector_store %arg6[%c0_13, %c0_14], %20 {strides = array<i32>} : memref<8x128xf32, #tpu.memory_space<vmem>>, vector<8x128xf32>,
    return
  }
  func.func @transform_0(%arg0: i32) -> (i32, i32) {
    %c0_i32 = arith.constant 0 : i32
    %c0_i32_0 = arith.constant 0 : i32
    return %c0_i32, %arg0 : i32, i32
  }
  func.func @transform_1(%arg0: i32) -> (i32, i32) {
    %c0_i32 = arith.constant 0 : i32
    %c0_i32_0 = arith.constant 0 : i32
    %c0_i32_1 = arith.constant 0 : i32
    return %c0_i32, %c0_i32_0 : i32, i32
  }
  func.func @transform_2(%arg0: i32) -> (i32, i32) {
    %c0_i32 = arith.constant 0 : i32
    %c0_i32_0 = arith.constant 0 : i32
    %c0_i32_1 = arith.constant 0 : i32
    return %c0_i32, %c0_i32_0 : i32, i32
  }
  func.func @transform_3(%arg0: i32) -> (i32, i32) {
    %c0_i32 = arith.constant 0 : i32
    %c0_i32_0 = arith.constant 0 : i32
    %c0_i32_1 = arith.constant 0 : i32
    return %c0_i32, %c0_i32_0 : i32, i32
  }
  func.func @transform_4(%arg0: i32) -> (i32, i32) {
    %c0_i32 = arith.constant 0 : i32
    %c0_i32_0 = arith.constant 0 : i32
    %c0_i32_1 = arith.constant 0 : i32
    return %c0_i32, %c0_i32_0 : i32, i32
  }
  func.func @transform_5(%arg0: i32) -> (i32, i32) {
    %c0_i32 = arith.constant 0 : i32
    %c0_i32_0 = arith.constant 0 : i32
    return %c0_i32, %arg0 : i32, i32
  }
}

</mosaic_0001>

<llo_original>
// kernel: tpu_custom_call.1
$region0: #{tpu_custom_call.1}
  #allocation0 [shape = 'u32[]', space=smem, size = 0x4, offset = 0x4, fixed_abs, tag = 'smem constant byte address 0x4 - core index']
  #allocation1 [shape = 'u32[72,128]{1,0:T(1,128)}', space=vmem, size = 0x9000, scoped, tag = 'internal scratch']
  %s0 = inlined_call_operand.vmem [shape: f32[48,256], index: 0, kind: input, shape index: {}]
  %s1 = inlined_call_operand.vmem [shape: f32[224,48], index: 1, kind: input, shape index: {}]
  %s2 = inlined_call_operand.vmem [shape: f32[160,112], index: 2, kind: input, shape index: {}]
  %s3 = inlined_call_operand.vmem [shape: f32[8,160], index: 3, kind: input, shape index: {}]
  %s4 = inlined_call_operand.vmem [shape: f32[8,1], index: 4, kind: input, shape index: {}]
  %s5 = inlined_call_operand.hbm [shape: f32[8,256], index: 5, kind: output, shape index: {}]
  %s6 = sld [smem:[#allocation0]]
  $region91: #{tpu_custom_call.1} parent=0
    _
  %s8 = ssub.s32 1, %s6
  %s9 = scalar_select 0, %s8, %s6
  $region1: #{tpu_custom_call.1} parent=0
    #allocation2 [shape = 'u8[49152]{0}', space=vmem, size = 0xc000, scoped, tag = 'input window, operand 0']
    #allocation3 [shape = 'u8[8192]{0}', space=vmem, size = 0x2000, scoped, tag = 'output window, operand 0']
    #allocation4 [shape = 's32[2]{0}', space=sflag, size = 0x8, scoped, tag = 'scoped memory for tpu_custom_call.1']
    %10 = vsyncpa [#allocation4], 0
    %s11 = scalar_lea.sflag [#allocation4], 1
    %12 = vsyncpa %s11, 0
    loop: start=0, step=1, limit=4
    $region2: #{tpu_custom_call.1} parent=1 // loop_pre_header
      _
    $region3: #{tpu_custom_call.1} parent=1 // loop_header
      %s14 = sphi 0, %s18
      %p15 = scmp.ge.s32.totalorder %s14, 4
      %s24 = sphi 0, %s26
      %s27 = sphi 0, %s24
      %s28 = sphi 0, %s27
      %s44 = sphi 0, %s28
      %s48 = sphi 0, %s48
      %s50 = sphi 0, %s48
      %s51 = sphi 0, %s50
      %s65 = sphi 0, %s51
      %s69 = sphi 0, %s69
      %s71 = sphi 0, %s69
      %s72 = sphi 0, %s71
      %s86 = sphi 0, %s72
      %s90 = sphi 0, %s90
      %s92 = sphi 0, %s90
      %s93 = sphi 0, %s92
      %s107 = sphi 0, %s93
      %s111 = sphi 0, %s111
      %s113 = sphi 0, %s111
      %s114 = sphi 0, %s113
      %s128 = sphi 0, %s114
      %s134 = sphi 0, %s136
      %s137 = sphi 0, %s134
      %s138 = sphi 0, %s137
      %s154 = sphi 0, %s138
    $region4: #{tpu_custom_call.1} parent=1 // loop_header_branch
      %17 = sbr.rel (%p15) target = $region8
    $region5: #{tpu_custom_call.1} parent=1 // loop_body
      %s19 = ssub.s32 %s14, 1
      %s20 = ssub.s32 %s14, 2
      %s21 = sadd.s32 %s14, 1
      %s22 = ssub.s32 %s14, %s21
      %p23 = scmp.eq.s32.totalorder %s22, 0
      %s25 = sadd.s32 %s24, 1
      %s26 = scalar_select %p23, %s24, %s25
      %p29 = pneg %p23
      %p30 = scmp.eq.s32.totalorder %s14, 1
      %p31 = por %p29, %p30
      %p32 = scmp.ne.s32.totalorder %s24, %s27
      %p33 = scmp.eq.s32.totalorder %s14, 0
      %p34 = por %p32, %p33
      %p35 = scmp.ne.s32.totalorder %s24, %s27
      %p36 = scmp.eq.s32.totalorder %s19, 1
      %p37 = por %p35, %p36
      %p38 = scmp.ne.s32.totalorder %s27, %s28
      %p39 = scmp.eq.s32.totalorder %s19, 0
      %p40 = por %p38, %p39
      %p41 = scmp.ne.s32.totalorder %s27, %s28
      %p42 = scmp.eq.s32.totalorder %s20, 1
      %p43 = por %p41, %p42
      %p45 = scmp.ne.s32.totalorder %s28, %s44
      %p46 = scmp.eq.s32.totalorder %s20, 0
      %p47 = por %p45, %p46
      %s49 = sadd.s32 %s48, 1
      %p52 = scmp.eq.s32.totalorder %s14, 1
      %p53 = scmp.ne.s32.totalorder %s48, %s50
      %p54 = scmp.eq.s32.totalorder %s14, 0
      %p55 = por %p53, %p54
      %p56 = scmp.ne.s32.totalorder %s48, %s50
      %p57 = scmp.eq.s32.totalorder %s19, 1
      %p58 = por %p56, %p57
      %p59 = scmp.ne.s32.totalorder %s50, %s51
      %p60 = scmp.eq.s32.totalorder %s19, 0
      %p61 = por %p59, %p60
      %p62 = scmp.ne.s32.totalorder %s50, %s51
      %p63 = scmp.eq.s32.totalorder %s20, 1
      %p64 = por %p62, %p63
      %p66 = scmp.ne.s32.totalorder %s51, %s65
      %p67 = scmp.eq.s32.totalorder %s20, 0
      %p68 = por %p66, %p67
      %s70 = sadd.s32 %s69, 1
      %p73 = scmp.eq.s32.totalorder %s14, 1
      %p74 = scmp.ne.s32.totalorder %s69, %s71
      %p75 = scmp.eq.s32.totalorder %s14, 0
      %p76 = por %p74, %p75
      %p77 = scmp.ne.s32.totalorder %s69, %s71
      %p78 = scmp.eq.s32.totalorder %s19, 1
      %p79 = por %p77, %p78
      %p80 = scmp.ne.s32.totalorder %s71, %s72
      %p81 = scmp.eq.s32.totalorder %s19, 0
      %p82 = por %p80, %p81
      %p83 = scmp.ne.s32.totalorder %s71, %s72
      %p84 = scmp.eq.s32.totalorder %s20, 1
      %p85 = por %p83, %p84
      %p87 = scmp.ne.s32.totalorder %s72, %s86
      %p88 = scmp.eq.s32.totalorder %s20, 0
      %p89 = por %p87, %p88
      %s91 = sadd.s32 %s90, 1
      %p94 = scmp.eq.s32.totalorder %s14, 1
      %p95 = scmp.ne.s32.totalorder %s90, %s92
      %p96 = scmp.eq.s32.totalorder %s14, 0
      %p97 = por %p95, %p96
      %p98 = scmp.ne.s32.totalorder %s90, %s92
      %p99 = scmp.eq.s32.totalorder %s19, 1
      %p100 = por %p98, %p99
      %p101 = scmp.ne.s32.totalorder %s92, %s93
      %p102 = scmp.eq.s32.totalorder %s19, 0
      %p103 = por %p101, %p102
      %p104 = scmp.ne.s32.totalorder %s92, %s93
      %p105 = scmp.eq.s32.totalorder %s20, 1
      %p106 = por %p104, %p105
      %p108 = scmp.ne.s32.totalorder %s93, %s107
      %p109 = scmp.eq.s32.totalorder %s20, 0
      %p110 = por %p108, %p109
      %s112 = sadd.s32 %s111, 1
      %p115 = scmp.eq.s32.totalorder %s14, 1
      %p116 = scmp.ne.s32.totalorder %s111, %s113
      %p117 = scmp.eq.s32.totalorder %s14, 0
      %p118 = por %p116, %p117
      %p119 = scmp.ne.s32.totalorder %s111, %s113
      %p120 = scmp.eq.s32.totalorder %s19, 1
      %p121 = por %p119, %p120
      %p122 = scmp.ne.s32.totalorder %s113, %s114
      %p123 = scmp.eq.s32.totalorder %s19, 0
      %p124 = por %p122, %p123
      %p125 = scmp.ne.s32.totalorder %s113, %s114
      %p126 = scmp.eq.s32.totalorder %s20, 1
      %p127 = por %p125, %p126
      %p129 = scmp.ne.s32.totalorder %s114, %s128
      %p130 = scmp.eq.s32.totalorder %s20, 0
      %p131 = por %p129, %p130
      %s132 = ssub.s32 %s14, %s21
      %p133 = scmp.eq.s32.totalorder %s132, 0
      %s135 = sadd.s32 %s134, 1
      %s136 = scalar_select %p133, %s134, %s135
      %p139 = pneg %p133
      %p140 = scmp.eq.s32.totalorder %s14, 1
      %p141 = por %p139, %p140
      %p142 = scmp.ne.s32.totalorder %s134, %s137
      %p143 = scmp.eq.s32.totalorder %s14, 0
      %p144 = por %p142, %p143
      %p145 = scmp.ne.s32.totalorder %s134, %s137
      %p146 = scmp.eq.s32.totalorder %s19, 1
      %p147 = por %p145, %p146
      %p148 = scmp.ne.s32.totalorder %s137, %s138
      %p149 = scmp.eq.s32.totalorder %s19, 0
      %p150 = por %p148, %p149
      %p151 = scmp.ne.s32.totalorder %s137, %s138
      %p152 = scmp.eq.s32.totalorder %s20, 1
      %p153 = por %p151, %p152
      %p155 = scmp.ne.s32.totalorder %s138, %s154
      %p156 = scmp.eq.s32.totalorder %s20, 0
      %p157 = por %p155, %p156
      %p158 = scmp.le.s32.totalorder 1, %s14
      %p159 = scmp.lt.s32.totalorder %s14, 3
      %p160 = pnand %p158, %p159
      %p161 = pneg %p160
      // Predicated region
      $region9: #{tpu_custom_call.1} parent=5 // pred_check
        _
      $region10: #{tpu_custom_call.1} parent=5 // pred_check_branch
        %163 = sbr.rel (%p160) target = $region12
      $region11: #{tpu_custom_call.1} parent=5 // pred_region
        %s164 = ssub.s32 %s14, 1
        // Predicated region
        $region13: #{tpu_custom_call.1} parent=11 // pred_check
          %p165 = pneg %p61
        $region14: #{tpu_custom_call.1} parent=11 // pred_check_branch
          %167 = sbr.rel (%p165) target = $region16
        $region15: #{tpu_custom_call.1} parent=11 // pred_region
          _
        $region16: #{tpu_custom_call.1} parent=11 // pred_fallthru
          _
        // Predicated region
        $region17: #{tpu_custom_call.1} parent=11 // pred_check
          %p168 = pneg %p82
        $region18: #{tpu_custom_call.1} parent=11 // pred_check_branch
          %170 = sbr.rel (%p168) target = $region20
        $region19: #{tpu_custom_call.1} parent=11 // pred_region
          _
        $region20: #{tpu_custom_call.1} parent=11 // pred_fallthru
          _
        // Predicated region
        $region21: #{tpu_custom_call.1} parent=11 // pred_check
          %p171 = pneg %p103
        $region22: #{tpu_custom_call.1} parent=11 // pred_check_branch
          %173 = sbr.rel (%p171) target = $region24
        $region23: #{tpu_custom_call.1} parent=11 // pred_region
          _
        $region24: #{tpu_custom_call.1} parent=11 // pred_fallthru
          _
        // Predicated region
        $region25: #{tpu_custom_call.1} parent=11 // pred_check
          %p174 = pneg %p124
        $region26: #{tpu_custom_call.1} parent=11 // pred_check_branch
          %176 = sbr.rel (%p174) target = $region28
        $region27: #{tpu_custom_call.1} parent=11 // pred_region
          _
        $region28: #{tpu_custom_call.1} parent=11 // pred_fallthru
          _
      $region12: #{tpu_custom_call.1} parent=5 // pred_fallthru
        _
      %p177 = scmp.lt.s32.totalorder %s14, 2
      // Predicated region
      $region29: #{tpu_custom_call.1} parent=5 // pred_check
        %p178 = pneg %p177
      $region30: #{tpu_custom_call.1} parent=5 // pred_check_branch
        %180 = sbr.rel (%p178) target = $region32
      $region31: #{tpu_custom_call.1} parent=5 // pred_region
        // Predicated region
        $region33: #{tpu_custom_call.1} parent=31 // pred_check
          %p181 = pneg %p34
        $region34: #{tpu_custom_call.1} parent=31 // pred_check_branch
          %183 = sbr.rel (%p181) target = $region36
        $region35: #{tpu_custom_call.1} parent=31 // pred_region
          %s184 = sand.u32 %s24, 1
          %s185 = sand.u32 %s24, 1
          %s186 = smul.addr %s185, 48
          %s187 = scalar_lea.vmem [#allocation2], %s186
          %s188 = smul.addr %s14, 8
          %s189 = scalar_lea.vmem %s0, %s188
          // Predicated region
          $region37: #{tpu_custom_call.1} parent=35 // pred_check
            _
          $region38: #{tpu_custom_call.1} parent=35 // pred_check_branch
            %191 = sbr.rel (0) target = $region40
          $region39: #{tpu_custom_call.1} parent=35 // pred_region
            // Predicated region
            $region41: #{tpu_custom_call.1} parent=39 // pred_check
              _
            $region42: #{tpu_custom_call.1} parent=39 // pred_check_branch
              %193 = sbr.rel (0) target = $region44
            $region43: #{tpu_custom_call.1} parent=39 // pred_region
              // Predicated region
              $region56: #{tpu_custom_call.1} parent=43 // pred_check
                _
              $region57: #{tpu_custom_call.1} parent=43 // pred_check_branch
                %219 = sbr.rel (0) target = $region59
              $region58: #{tpu_custom_call.1} parent=43 // pred_region
                loop: start=0, step=1, limit=1
                $region60: #{tpu_custom_call.1} parent=58 // loop_pre_header
                  _
                $region61: #{tpu_custom_call.1} parent=58 // loop_header
                  %s221 = sphi 0, %s225
                  %p222 = scmp.ge.s32.totalorder %s221, 1
                  %s226 = sphi %s189, %s189
                  %s227 = sphi %s187, %s187
                $region62: #{tpu_custom_call.1} parent=58 // loop_header_branch
                  %224 = sbr.rel (%p222) target = $region66
                $region63: #{tpu_custom_call.1} parent=58 // loop_body
                  %v228 = vld [vmem:[%s226] sm:$0xff]
                  %229 = vst [vmem:[%s227] sm:$0xff] %v228
                  %v230 = vld [vmem:[%s226 + $0x10] sm:$0xff]
                  %231 = vst [vmem:[%s227 + $0x8] sm:$0xff] %v230
                  %v232 = vld [vmem:[%s226 + $0x20] sm:$0xff]
                  %233 = vst [vmem:[%s227 + $0x10] sm:$0xff] %v232
                  %v234 = vld [vmem:[%s226 + $0x30] sm:$0xff]
                  %235 = vst [vmem:[%s227 + $0x18] sm:$0xff] %v234
                  %v236 = vld [vmem:[%s226 + $0x40] sm:$0xff]
                  %237 = vst [vmem:[%s227 + $0x20] sm:$0xff] %v236
                  %v238 = vld [vmem:[%s226 + $0x50] sm:$0xff]
                  %239 = vst [vmem:[%s227 + $0x28] sm:$0xff] %v238
                $region64: #{tpu_custom_call.1} parent=58 // loop_footer
                  %s225 = sadd.s32 1, %s221
                $region65: #{tpu_custom_call.1} parent=58 // loop_footer_branch
                  %220 = sbr.rel target = $region61
                $region66: #{tpu_custom_call.1} parent=58 // loop_exit
                  _
              $region59: #{tpu_custom_call.1} parent=43 // pred_fallthru
                _
              // Predicated region
              $region67: #{tpu_custom_call.1} parent=43 // pred_check
                _
              $region68: #{tpu_custom_call.1} parent=43 // pred_check_branch
                %241 = sbr.rel target = $region70
              $region69: #{tpu_custom_call.1} parent=43 // pred_region
                _
              $region70: #{tpu_custom_call.1} parent=43 // pred_fallthru
                _
            $region44: #{tpu_custom_call.1} parent=39 // pred_fallthru
              _
            // Predicated region
            $region45: #{tpu_custom_call.1} parent=39 // pred_check
              _
            $region46: #{tpu_custom_call.1} parent=39 // pred_check_branch
              %195 = sbr.rel target = $region48
            $region47: #{tpu_custom_call.1} parent=39 // pred_region
              %s197 = ssub.s32 256, 1
              loop: start=0, step=1, limit=1
              $region49: #{tpu_custom_call.1} parent=47 // loop_pre_header
                _
              $region50: #{tpu_custom_call.1} parent=47 // loop_header
                %s199 = sphi 0, %s203
                %p200 = scmp.ge.s32.totalorder %s199, 1
                %s204 = sphi %s189, %s189
                %s205 = sphi %s187, %s187
              $region51: #{tpu_custom_call.1} parent=47 // loop_header_branch
                %202 = sbr.rel (%p200) target = $region55
              $region52: #{tpu_custom_call.1} parent=47 // loop_body
                %v206 = vld [vmem:[%s204] sm:%s197]
                %207 = vst [vmem:[%s205] sm:%s197] %v206
                %v208 = vld [vmem:[%s204 + $0x10] sm:%s197]
                %209 = vst [vmem:[%s205 + $0x8] sm:%s197] %v208
                %v210 = vld [vmem:[%s204 + $0x20] sm:%s197]
                %211 = vst [vmem:[%s205 + $0x10] sm:%s197] %v210
                %v212 = vld [vmem:[%s204 + $0x30] sm:%s197]
                %213 = vst [vmem:[%s205 + $0x18] sm:%s197] %v212
                %v214 = vld [vmem:[%s204 + $0x40] sm:%s197]
                %215 = vst [vmem:[%s205 + $0x20] sm:%s197] %v214
                %v216 = vld [vmem:[%s204 + $0x50] sm:%s197]
                %217 = vst [vmem:[%s205 + $0x28] sm:%s197] %v216
              $region53: #{tpu_custom_call.1} parent=47 // loop_footer
                %s203 = sadd.s32 1, %s199
              $region54: #{tpu_custom_call.1} parent=47 // loop_footer_branch
                %198 = sbr.rel target = $region50
              $region55: #{tpu_custom_call.1} parent=47 // loop_exit
                _
            $region48: #{tpu_custom_call.1} parent=39 // pred_fallthru
              _
          $region40: #{tpu_custom_call.1} parent=35 // pred_fallthru
            _
          %242 = vnop
        $region36: #{tpu_custom_call.1} parent=31 // pred_fallthru
          _
      $region32: #{tpu_custom_call.1} parent=5 // pred_fallthru
        _
      %p243 = scmp.le.s32.totalorder 1, %s14
      %p244 = scmp.lt.s32.totalorder %s14, 3
      %p245 = pnand %p243, %p244
      %p246 = pneg %p245
      // Predicated region
      $region71: #{tpu_custom_call.1} parent=5 // pred_check
        _
      $region72: #{tpu_custom_call.1} parent=5 // pred_check_branch
        %248 = sbr.rel (%p245) target = $region74
      $region73: #{tpu_custom_call.1} parent=5 // pred_region
        %s249 = ssub.s32 %s14, 1
        %s250 = sand.u32 %s27, 1
        %s251 = sand.u32 %s27, 1
        %s252 = smul.addr %s251, 48
        %s253 = scalar_lea.vmem [#allocation2], %s252
        // Predicated region
        $region75: #{tpu_custom_call.1} parent=73 // pred_check
          %p254 = pneg %p40
        $region76: #{tpu_custom_call.1} parent=73 // pred_check_branch
          %256 = sbr.rel (%p254) target = $region78
        $region77: #{tpu_custom_call.1} parent=73 // pred_region
          _
        $region78: #{tpu_custom_call.1} parent=73 // pred_fallthru
          _
        %s257 = sand.u32 %s27, 1
        %s258 = sand.u32 %s27, 1
        %s259 = smul.addr %s258, 48
        %s260 = scalar_lea.vmem [#allocation2], %s259
        %p261 = pneg %p40
        %p262 = pneg %p37
        %p263 = pneg %p61
        %p264 = pneg %p58
        %p265 = pneg %p82
        %p266 = pneg %p79
        %p267 = pneg %p103
        %p268 = pneg %p100
        %p269 = pneg %p124
        %p270 = pneg %p121
        %p271 = pneg %p150
        %p272 = pneg %p147
        %s273 = sand.u32 %s137, 1
        %s274 = scalar_lea.sflag [#allocation4], %s273
        %s275 = sand.u32 %s137, 1
        %s276 = smul.addr %s275, 8
        %s277 = scalar_lea.vmem [#allocation3], %s276
        %v278 = vld [vmem:[%s253] sm:$0xff]
        %v279 = vld [vmem:[%s253 + $0x8] sm:$0xff]
        %v280 = vld [vmem:[%s253 + $0x10] sm:$0xff]
        %v281 = vld [vmem:[%s253 + $0x18] sm:$0xff]
        %v282 = vld [vmem:[%s253 + $0x20] sm:$0xff]
        %v283 = vld [vmem:[%s253 + $0x28] sm:$0xff]
        %v284 = vld [vmem:[%s1] sm:$0xff]
        %v285 = vld [vmem:[%s1 + $0x8] sm:$0xff]
        %v286 = vld [vmem:[%s1 + $0x10] sm:$0xff]
        %v287 = vld [vmem:[%s1 + $0x18] sm:$0xff]
        %v288 = vld [vmem:[%s1 + $0x20] sm:$0xff]
        %v289 = vld [vmem:[%s1 + $0x28] sm:$0xff]
        %v290 = vld [vmem:[%s1 + $0x30] sm:$0xff]
        %v291 = vld [vmem:[%s1 + $0x38] sm:$0xff]
        %v292 = vld [vmem:[%s1 + $0x40] sm:$0xff]
        %v293 = vld [vmem:[%s1 + $0x48] sm:$0xff]
        %v294 = vld [vmem:[%s1 + $0x50] sm:$0xff]
        %v295 = vld [vmem:[%s1 + $0x58] sm:$0xff]
        %v296 = vld [vmem:[%s1 + $0x60] sm:$0xff]
        %v297 = vld [vmem:[%s1 + $0x68] sm:$0xff]
        %v298 = vld [vmem:[%s1 + $0x70] sm:$0xff]
        %v299 = vld [vmem:[%s1 + $0x78] sm:$0xff]
        %v300 = vld [vmem:[%s1 + $0x80] sm:$0xff]
        %v301 = vld [vmem:[%s1 + $0x88] sm:$0xff]
        %v302 = vld [vmem:[%s1 + $0x90] sm:$0xff]
        %v303 = vld [vmem:[%s1 + $0x98] sm:$0xff]
        %v304 = vld [vmem:[%s1 + $0xa0] sm:$0xff]
        %v305 = vld [vmem:[%s1 + $0xa8] sm:$0xff]
        %v306 = vld [vmem:[%s1 + $0xb0] sm:$0xff]
        %v307 = vld [vmem:[%s1 + $0xb8] sm:$0xff]
        %v308 = vld [vmem:[%s1 + $0xc0] sm:$0xff]
        %v309 = vld [vmem:[%s1 + $0xc8] sm:$0xff]
        %v310 = vld [vmem:[%s1 + $0xd0] sm:$0xff]
        %v311 = vld [vmem:[%s1 + $0xd8] sm:$0xff]
        %vm312 = vcmask 392192
        %v314 = vsel %vm312, %v284, 0
        %v317 = vsel %vm312, %v285, 0
        %v320 = vsel %vm312, %v286, 0
        %v323 = vsel %vm312, %v287, 0
        %v326 = vsel %vm312, %v288, 0
        %v329 = vsel %vm312, %v289, 0
        %v332 = vsel %vm312, %v290, 0
        %v335 = vsel %vm312, %v291, 0
        %v338 = vsel %vm312, %v292, 0
        %v341 = vsel %vm312, %v293, 0
        %v344 = vsel %vm312, %v294, 0
        %v347 = vsel %vm312, %v295, 0
        %v350 = vsel %vm312, %v296, 0
        %v353 = vsel %vm312, %v297, 0
        %v356 = vsel %vm312, %v298, 0
        %v359 = vsel %vm312, %v299, 0
        %v362 = vsel %vm312, %v300, 0
        %v365 = vsel %vm312, %v301, 0
        %v368 = vsel %vm312, %v302, 0
        %v371 = vsel %vm312, %v303, 0
        %v374 = vsel %vm312, %v304, 0
        %v377 = vsel %vm312, %v305, 0
        %v380 = vsel %vm312, %v306, 0
        %v383 = vsel %vm312, %v307, 0
        %v386 = vsel %vm312, %v308, 0
        %v389 = vsel %vm312, %v309, 0
        %v392 = vsel %vm312, %v310, 0
        %v395 = vsel %vm312, %v311, 0
        %397 = vmatpush.msra.mxu0 0.0
        %398 = vmatpush.msra.mxu0 0.0
        %399 = vmatpush.msra.mxu0 0.0
        %400 = vmatpush.msra.mxu0 0.0
        %401 = vmatpush.msra.mxu0 0.0
        %402 = vmatpush.msra.mxu0 0.0
        %403 = vmatpush.msra.mxu0 0.0
        %404 = vmatpush.msra.mxu0 0.0
        %405 = vmatpush.msra.mxu0 0.0
        %406 = vmatpush.msra.mxu0 0.0
        %407 = vmatpush.msra.mxu0 %v283
        %408 = vmatpush.msra.mxu0 %v282
        %409 = vmatpush.msra.mxu0 %v281
        %410 = vmatpush.msra.mxu0 %v280
        %411 = vmatpush.msra.mxu0 %v279
        %412 = vmatpush.msra.mxu0 %v278
        %413 = vmatmul.f32.gmra.mxu0 %v314
        %v414 = vpop.f32.mrf.mxu0
        %v415 = vadd.f32 0.0, %v414
        %416 = vmatmul.f32.gmra.mxu0 %v317
        %v417 = vpop.f32.mrf.mxu0
        %v418 = vadd.f32 0.0, %v417
        %419 = vmatmul.f32.gmra.mxu0 %v320
        %v420 = vpop.f32.mrf.mxu0
        %v421 = vadd.f32 0.0, %v420
        %422 = vmatmul.f32.gmra.mxu0 %v323
        %v423 = vpop.f32.mrf.mxu0
        %v424 = vadd.f32 0.0, %v423
        %425 = vmatmul.f32.gmra.mxu0 %v326
        %v426 = vpop.f32.mrf.mxu0
        %v427 = vadd.f32 0.0, %v426
        %428 = vmatmul.f32.gmra.mxu0 %v329
        %v429 = vpop.f32.mrf.mxu0
        %v430 = vadd.f32 0.0, %v429
        %431 = vmatmul.f32.gmra.mxu0 %v332
        %v432 = vpop.f32.mrf.mxu0
        %v433 = vadd.f32 0.0, %v432
        %434 = vmatmul.f32.gmra.mxu0 %v335
        %v435 = vpop.f32.mrf.mxu0
        %v436 = vadd.f32 0.0, %v435
        %437 = vmatmul.f32.gmra.mxu0 %v338
        %v438 = vpop.f32.mrf.mxu0
        %v439 = vadd.f32 0.0, %v438
        %440 = vmatmul.f32.gmra.mxu0 %v341
        %v441 = vpop.f32.mrf.mxu0
        %v442 = vadd.f32 0.0, %v441
        %443 = vmatmul.f32.gmra.mxu0 %v344
        %v444 = vpop.f32.mrf.mxu0
        %v445 = vadd.f32 0.0, %v444
        %446 = vmatmul.f32.gmra.mxu0 %v347
        %v447 = vpop.f32.mrf.mxu0
        %v448 = vadd.f32 0.0, %v447
        %449 = vmatmul.f32.gmra.mxu0 %v350
        %v450 = vpop.f32.mrf.mxu0
        %v451 = vadd.f32 0.0, %v450
        %452 = vmatmul.f32.gmra.mxu0 %v353
        %v453 = vpop.f32.mrf.mxu0
        %v454 = vadd.f32 0.0, %v453
        %455 = vmatmul.f32.gmra.mxu0 %v356
        %v456 = vpop.f32.mrf.mxu0
        %v457 = vadd.f32 0.0, %v456
        %458 = vmatmul.f32.gmra.mxu0 %v359
        %v459 = vpop.f32.mrf.mxu0
        %v460 = vadd.f32 0.0, %v459
        %461 = vmatmul.f32.gmra.mxu0 %v362
        %v462 = vpop.f32.mrf.mxu0
        %v463 = vadd.f32 0.0, %v462
        %464 = vmatmul.f32.gmra.mxu0 %v365
        %v465 = vpop.f32.mrf.mxu0
        %v466 = vadd.f32 0.0, %v465
        %467 = vmatmul.f32.gmra.mxu0 %v368
        %v468 = vpop.f32.mrf.mxu0
        %v469 = vadd.f32 0.0, %v468
        %470 = vmatmul.f32.gmra.mxu0 %v371
        %v471 = vpop.f32.mrf.mxu0
        %v472 = vadd.f32 0.0, %v471
        %473 = vmatmul.f32.gmra.mxu0 %v374
        %v474 = vpop.f32.mrf.mxu0
        %v475 = vadd.f32 0.0, %v474
        %476 = vmatmul.f32.gmra.mxu0 %v377
        %v477 = vpop.f32.mrf.mxu0
        %v478 = vadd.f32 0.0, %v477
        %479 = vmatmul.f32.gmra.mxu0 %v380
        %v480 = vpop.f32.mrf.mxu0
        %v481 = vadd.f32 0.0, %v480
        %482 = vmatmul.f32.gmra.mxu0 %v383
        %v483 = vpop.f32.mrf.mxu0
        %v484 = vadd.f32 0.0, %v483
        %485 = vmatmul.f32.gmra.mxu0 %v386
        %v486 = vpop.f32.mrf.mxu0
        %v487 = vadd.f32 0.0, %v486
        %488 = vmatmul.f32.gmra.mxu0 %v389
        %v489 = vpop.f32.mrf.mxu0
        %v490 = vadd.f32 0.0, %v489
        %491 = vmatmul.f32.gmra.mxu0 %v392
        %v492 = vpop.f32.mrf.mxu0
        %v493 = vadd.f32 0.0, %v492
        %494 = vmatmul.f32.gmra.mxu0 %v395
        %v495 = vpop.f32.mrf.mxu0
        %v496 = vadd.f32 0.0, %v495
        %497 = vdwg.mxu0
        %v498 = vmax.f32 %v415, 0.0
        %v499 = vmax.f32 %v418, 0.0
        %v500 = vmax.f32 %v421, 0.0
        %v501 = vmax.f32 %v424, 0.0
        %v502 = vmax.f32 %v427, 0.0
        %v503 = vmax.f32 %v430, 0.0
        %v504 = vmax.f32 %v433, 0.0
        %v505 = vmax.f32 %v436, 0.0
        %v506 = vmax.f32 %v439, 0.0
        %v507 = vmax.f32 %v442, 0.0
        %v508 = vmax.f32 %v445, 0.0
        %v509 = vmax.f32 %v448, 0.0
        %v510 = vmax.f32 %v451, 0.0
        %v511 = vmax.f32 %v454, 0.0
        %v512 = vmax.f32 %v457, 0.0
        %v513 = vmax.f32 %v460, 0.0
        %v514 = vmax.f32 %v463, 0.0
        %v515 = vmax.f32 %v466, 0.0
        %v516 = vmax.f32 %v469, 0.0
        %v517 = vmax.f32 %v472, 0.0
        %v518 = vmax.f32 %v475, 0.0
        %v519 = vmax.f32 %v478, 0.0
        %v520 = vmax.f32 %v481, 0.0
        %v521 = vmax.f32 %v484, 0.0
        %v522 = vmax.f32 %v487, 0.0
        %v523 = vmax.f32 %v490, 0.0
        %v524 = vmax.f32 %v493, 0.0
        %v525 = vmax.f32 %v496, 0.0
        %v526 = vmax.f32 %v498, %v500
        %v527 = vmax.f32 %v499, %v501
        %v528 = vmax.f32 %v502, %v504
        %v529 = vmax.f32 %v503, %v505
        %v530 = vmax.f32 %v506, %v508
        %v531 = vmax.f32 %v507, %v509
        %v532 = vmax.f32 %v510, %v512
        %v533 = vmax.f32 %v511, %v513
        %v534 = vmax.f32 %v514, %v516
        %v535 = vmax.f32 %v515, %v517
        %v536 = vmax.f32 %v518, %v520
        %v537 = vmax.f32 %v519, %v521
        %v538 = vmax.f32 %v522, %v524
        %v539 = vmax.f32 %v523, %v525
        %v540 = vld [vmem:[%s2] sm:$0xff]
        %v541 = vld [vmem:[%s2 + $0x8] sm:$0xff]
        %v542 = vld [vmem:[%s2 + $0x10] sm:$0xff]
        %v543 = vld [vmem:[%s2 + $0x18] sm:$0xff]
        %v544 = vld [vmem:[%s2 + $0x20] sm:$0xff]
        %v545 = vld [vmem:[%s2 + $0x28] sm:$0xff]
        %v546 = vld [vmem:[%s2 + $0x30] sm:$0xff]
        %v547 = vld [vmem:[%s2 + $0x38] sm:$0xff]
        %v548 = vld [vmem:[%s2 + $0x40] sm:$0xff]
        %v549 = vld [vmem:[%s2 + $0x48] sm:$0xff]
        %v550 = vld [vmem:[%s2 + $0x50] sm:$0xff]
        %v551 = vld [vmem:[%s2 + $0x58] sm:$0xff]
        %v552 = vld [vmem:[%s2 + $0x60] sm:$0xff]
        %v553 = vld [vmem:[%s2 + $0x68] sm:$0xff]
        %v554 = vld [vmem:[%s2 + $0x70] sm:$0xff]
        %v555 = vld [vmem:[%s2 + $0x78] sm:$0xff]
        %v556 = vld [vmem:[%s2 + $0x80] sm:$0xff]
        %v557 = vld [vmem:[%s2 + $0x88] sm:$0xff]
        %v558 = vld [vmem:[%s2 + $0x90] sm:$0xff]
        %v559 = vld [vmem:[%s2 + $0x98] sm:$0xff]
        %vm560 = vcmask 916480
        %v562 = vsel %vm560, %v540, 0
        %v565 = vsel %vm560, %v541, 0
        %v568 = vsel %vm560, %v542, 0
        %v571 = vsel %vm560, %v543, 0
        %v574 = vsel %vm560, %v544, 0
        %v577 = vsel %vm560, %v545, 0
        %v580 = vsel %vm560, %v546, 0
        %v583 = vsel %vm560, %v547, 0
        %v586 = vsel %vm560, %v548, 0
        %v589 = vsel %vm560, %v549, 0
        %v592 = vsel %vm560, %v550, 0
        %v595 = vsel %vm560, %v551, 0
        %v598 = vsel %vm560, %v552, 0
        %v601 = vsel %vm560, %v553, 0
        %v604 = vsel %vm560, %v554, 0
        %v607 = vsel %vm560, %v555, 0
        %v610 = vsel %vm560, %v556, 0
        %v613 = vsel %vm560, %v557, 0
        %v616 = vsel %vm560, %v558, 0
        %v619 = vsel %vm560, %v559, 0
        %621 = vmatpush.msra.mxu0 0.0
        %622 = vmatpush.msra.mxu0 0.0
        %623 = vmatpush.msra.mxu0 %v539
        %624 = vmatpush.msra.mxu0 %v538
        %625 = vmatpush.msra.mxu0 %v537
        %626 = vmatpush.msra.mxu0 %v536
        %627 = vmatpush.msra.mxu0 %v535
        %628 = vmatpush.msra.mxu0 %v534
        %629 = vmatpush.msra.mxu0 %v533
        %630 = vmatpush.msra.mxu0 %v532
        %631 = vmatpush.msra.mxu0 %v531
        %632 = vmatpush.msra.mxu0 %v530
        %633 = vmatpush.msra.mxu0 %v529
        %634 = vmatpush.msra.mxu0 %v528
        %635 = vmatpush.msra.mxu0 %v527
        %636 = vmatpush.msra.mxu0 %v526
        %637 = vmatmul.f32.gmra.mxu0 %v562
        %v638 = vpop.f32.mrf.mxu0
        %v639 = vadd.f32 0.0, %v638
        %640 = vmatmul.f32.gmra.mxu0 %v565
        %v641 = vpop.f32.mrf.mxu0
        %v642 = vadd.f32 0.0, %v641
        %643 = vmatmul.f32.gmra.mxu0 %v568
        %v644 = vpop.f32.mrf.mxu0
        %v645 = vadd.f32 0.0, %v644
        %646 = vmatmul.f32.gmra.mxu0 %v571
        %v647 = vpop.f32.mrf.mxu0
        %v648 = vadd.f32 0.0, %v647
        %649 = vmatmul.f32.gmra.mxu0 %v574
        %v650 = vpop.f32.mrf.mxu0
        %v651 = vadd.f32 0.0, %v650
        %652 = vmatmul.f32.gmra.mxu0 %v577
        %v653 = vpop.f32.mrf.mxu0
        %v654 = vadd.f32 0.0, %v653
        %655 = vmatmul.f32.gmra.mxu0 %v580
        %v656 = vpop.f32.mrf.mxu0
        %v657 = vadd.f32 0.0, %v656
        %658 = vmatmul.f32.gmra.mxu0 %v583
        %v659 = vpop.f32.mrf.mxu0
        %v660 = vadd.f32 0.0, %v659
        %661 = vmatmul.f32.gmra.mxu0 %v586
        %v662 = vpop.f32.mrf.mxu0
        %v663 = vadd.f32 0.0, %v662
        %664 = vmatmul.f32.gmra.mxu0 %v589
        %v665 = vpop.f32.mrf.mxu0
        %v666 = vadd.f32 0.0, %v665
        %667 = vmatmul.f32.gmra.mxu0 %v592
        %v668 = vpop.f32.mrf.mxu0
        %v669 = vadd.f32 0.0, %v668
        %670 = vmatmul.f32.gmra.mxu0 %v595
        %v671 = vpop.f32.mrf.mxu0
        %v672 = vadd.f32 0.0, %v671
        %673 = vmatmul.f32.gmra.mxu0 %v598
        %v674 = vpop.f32.mrf.mxu0
        %v675 = vadd.f32 0.0, %v674
        %676 = vmatmul.f32.gmra.mxu0 %v601
        %v677 = vpop.f32.mrf.mxu0
        %v678 = vadd.f32 0.0, %v677
        %679 = vmatmul.f32.gmra.mxu0 %v604
        %v680 = vpop.f32.mrf.mxu0
        %v681 = vadd.f32 0.0, %v680
        %682 = vmatmul.f32.gmra.mxu0 %v607
        %v683 = vpop.f32.mrf.mxu0
        %v684 = vadd.f32 0.0, %v683
        %685 = vmatmul.f32.gmra.mxu0 %v610
        %v686 = vpop.f32.mrf.mxu0
        %v687 = vadd.f32 0.0, %v686
        %688 = vmatmul.f32.gmra.mxu0 %v613
        %v689 = vpop.f32.mrf.mxu0
        %v690 = vadd.f32 0.0, %v689
        %691 = vmatmul.f32.gmra.mxu0 %v616
        %v692 = vpop.f32.mrf.mxu0
        %v693 = vadd.f32 0.0, %v692
        %694 = vmatmul.f32.gmra.mxu0 %v619
        %v695 = vpop.f32.mrf.mxu0
        %v696 = vadd.f32 0.0, %v695
        %697 = vdwg.mxu0
        %v698 = vmax.f32 %v639, 0.0
        %v699 = vmax.f32 %v642, 0.0
        %v700 = vmax.f32 %v645, 0.0
        %v701 = vmax.f32 %v648, 0.0
        %v702 = vmax.f32 %v651, 0.0
        %v703 = vmax.f32 %v654, 0.0
        %v704 = vmax.f32 %v657, 0.0
        %v705 = vmax.f32 %v660, 0.0
        %v706 = vmax.f32 %v663, 0.0
        %v707 = vmax.f32 %v666, 0.0
        %v708 = vmax.f32 %v669, 0.0
        %v709 = vmax.f32 %v672, 0.0
        %v710 = vmax.f32 %v675, 0.0
        %v711 = vmax.f32 %v678, 0.0
        %v712 = vmax.f32 %v681, 0.0
        %v713 = vmax.f32 %v684, 0.0
        %v714 = vmax.f32 %v687, 0.0
        %v715 = vmax.f32 %v690, 0.0
        %v716 = vmax.f32 %v693, 0.0
        %v717 = vmax.f32 %v696, 0.0
        %v718 = vld [vmem:[%s3] sm:$0xff]
        %v719 = vld [vmem:[%s3 + $0x8] sm:$0xff]
        %v720 = vld [vmem:[%s4] sm:$0xff]
        %722 = vset.pattern.permute.xlu0 0
        %723 = vperm.xlu0 %722, %v720
        %v724 = vpop.permute.xlu0 %723
        %vm726 = vcmask 261120
        %v728 = vsel %vm726, %v719, 0
        %730 = vmatpush.msra.mxu0 %v713
        %731 = vmatpush.msra.mxu0 %v712
        %732 = vmatpush.msra.mxu0 %v711
        %733 = vmatpush.msra.mxu0 %v710
        %734 = vmatpush.msra.mxu0 %v709
        %735 = vmatpush.msra.mxu0 %v708
        %736 = vmatpush.msra.mxu0 %v707
        %737 = vmatpush.msra.mxu0 %v706
        %738 = vmatpush.msra.mxu0 %v705
        %739 = vmatpush.msra.mxu0 %v704
        %740 = vmatpush.msra.mxu0 %v703
        %741 = vmatpush.msra.mxu0 %v702
        %742 = vmatpush.msra.mxu0 %v701
        %743 = vmatpush.msra.mxu0 %v700
        %744 = vmatpush.msra.mxu0 %v699
        %745 = vmatpush.msra.mxu0 %v698
        %746 = vmatmul.f32.gmra.mxu0 %v718
        %v747 = vpop.f32.mrf.mxu0
        %v748 = vadd.f32 %v724, %v747
        %749 = vdwg.mxu0
        %750 = vmatpush.msra.mxu0 0.0
        %751 = vmatpush.msra.mxu0 0.0
        %752 = vmatpush.msra.mxu0 0.0
        %753 = vmatpush.msra.mxu0 0.0
        %754 = vmatpush.msra.mxu0 0.0
        %755 = vmatpush.msra.mxu0 0.0
        %756 = vmatpush.msra.mxu0 0.0
        %757 = vmatpush.msra.mxu0 0.0
        %758 = vmatpush.msra.mxu0 0.0
        %759 = vmatpush.msra.mxu0 0.0
        %760 = vmatpush.msra.mxu0 0.0
        %761 = vmatpush.msra.mxu0 0.0
        %762 = vmatpush.msra.mxu0 %v717
        %763 = vmatpush.msra.mxu0 %v716
        %764 = vmatpush.msra.mxu0 %v715
        %765 = vmatpush.msra.mxu0 %v714
        %766 = vmatmul.f32.gmra.mxu0 %v728
        %v767 = vpop.f32.mrf.mxu0
        %v768 = vadd.f32 %v748, %v767
        %769 = vdwg.mxu0
        %770 = vst [vmem:[%s277] sm:$0xff] %v768
        %s771 = sand.u32 %s137, 1
        %s772 = scalar_lea.sflag [#allocation4], %s771
        %s773 = sand.u32 %s137, 1
        %s774 = smul.addr %s773, 8
        %s775 = scalar_lea.vmem [#allocation3], %s774
        // Predicated region
        $region79: #{tpu_custom_call.1} parent=73 // pred_check
          %p776 = pneg %p147
        $region80: #{tpu_custom_call.1} parent=73 // pred_check_branch
          %778 = sbr.rel (%p776) target = $region82
        $region81: #{tpu_custom_call.1} parent=73 // pred_region
          %780 = vsyncadd %s772, 0
          %s781 = smul.addr %s19, 8
          %s782 = scalar_lea.hbm %s5, %s781
          %s784 = sshll.u32 %s775, 4
          %s785 = int_to_ptr.vmem [resolvable:$true] %s784
          %s786 = sshll.u32 %s782, 4
          %s787 = int_to_ptr.hbm [resolvable:$true] %s786
          %789 = dma.vmem_to_hbm [thread:$0]  %s785, 128, %s787, %s772
        $region82: #{tpu_custom_call.1} parent=73 // pred_fallthru
          _
      $region74: #{tpu_custom_call.1} parent=5 // pred_fallthru
        _
      %p790 = scmp.le.s32.totalorder 2, %s14
      // Predicated region
      $region83: #{tpu_custom_call.1} parent=5 // pred_check
        %p791 = pneg %p790
      $region84: #{tpu_custom_call.1} parent=5 // pred_check_branch
        %793 = sbr.rel (%p791) target = $region86
      $region85: #{tpu_custom_call.1} parent=5 // pred_region
        %s794 = ssub.s32 %s14, 2
        // Predicated region
        $region87: #{tpu_custom_call.1} parent=85 // pred_check
          %p795 = pneg %p153
        $region88: #{tpu_custom_call.1} parent=85 // pred_check_branch
          %797 = sbr.rel (%p795) target = $region90
        $region89: #{tpu_custom_call.1} parent=85 // pred_region
          %s798 = sand.u32 %s138, 1
          %s799 = scalar_lea.sflag [#allocation4], %s798
          %s800 = sand.u32 %s138, 1
          %s801 = smul.addr %s800, 8
          %s802 = scalar_lea.vmem [#allocation3], %s801
          %804 = dma.done %s799, 128
        $region90: #{tpu_custom_call.1} parent=85 // pred_fallthru
          _
      $region86: #{tpu_custom_call.1} parent=5 // pred_fallthru
        _
    $region6: #{tpu_custom_call.1} parent=1 // loop_footer
      %s18 = sadd.s32 1, %s14
    $region7: #{tpu_custom_call.1} parent=1 // loop_footer_branch
      %13 = sbr.rel target = $region3
    $region8: #{tpu_custom_call.1} parent=1 // loop_exit
      _
    %805 = vsyncpa [#allocation4], 1
    %s806 = scalar_lea.sflag [#allocation4], 1
    %807 = vsyncpa %s806, 1

</llo_original>
